<compile_context>
chip_gen: v5e
topology: v5e:2x2
jax: 0.10.0
libtpu: 0.0.40
codegen_flags: <defaults>
</compile_context>

<pallas_src>
import functools

import jax
import jax.numpy as jnp
from jax import lax
from jax.experimental import pallas as pl
from jax.experimental.pallas import tpu as pltpu


def _agl_kernel(preds_ref, y_ref, inv_ref, w_ref, out_ref, *,
                N, T, penalty_weight, eps):
    """One grid step processes Bb batches (all math batched over axis 0).

    preds_ref : (Bb, K,  N)  factors, N in the lane dim
    y_ref     : (Bb, TD, N)  future returns, N in the lane dim
    inv_ref   : (Bb, K,  K)  precomputed (F^T F + eps I)^-1
    w_ref     : (1, TD)      value_decay**t * importance[d]
    out_ref   : (1, 8, 128)  block loss sum in element [0,0,0], zeros elsewhere
    """
    F = preds_ref[...]                                  # (Bb, K, N)
    Y = y_ref[...]                                      # (Bb, TD, N)
    Inv = inv_ref[...]                                  # (Bb, K, K)
    w = w_ref[...]                                      # (1, TD)

    # Batched contraction over the minor (lane / N) axis.
    contract_minor = (((2,), (2,)), ((0,), (0,)))

    # ---- R^2 term: one MXU pass per contraction over the whole block -------
    G = lax.dot_general(F, Y, contract_minor,
                        preferred_element_type=jnp.float32)          # (Bb,K,TD)
    FtF = lax.dot_general(F, F, contract_minor,
                          preferred_element_type=jnp.float32)        # (Bb,K,K)
    H = lax.dot_general(Inv, G, (((2,), (1,)), ((0,), (0,))),
                        preferred_element_type=jnp.float32)          # (Bb,K,TD)
    FtFH = lax.dot_general(FtF, H, (((2,), (1,)), ((0,), (0,))),
                           preferred_element_type=jnp.float32)       # (Bb,K,TD)

    sum_y = jnp.sum(Y, axis=2)                                       # (Bb, TD)
    sum_y2 = jnp.sum(Y * Y, axis=2)                                  # (Bb, TD)
    cross = jnp.sum(G * H, axis=1)                                   # y^T y_hat
    quad = jnp.sum(H * FtFH, axis=1)                                 # y_hat^T y_hat

    ss_res = sum_y2 - 2.0 * cross + quad                             # (Bb, TD)
    ss_tot = sum_y2 - sum_y * sum_y * (1.0 / N) + eps                # (Bb, TD)
    inv_tot = pl.reciprocal(ss_tot, approx=True)                     # EUP slot
    inv_tot = inv_tot * (2.0 - ss_tot * inv_tot)                     # Newton step
    r2 = 1.0 - ss_res * inv_tot                                      # (Bb, TD)
    loss_r2 = -jnp.sum(r2 * w, axis=1, keepdims=True) * (1.0 / T)    # (Bb, 1)

    # ---- factor-correlation penalty (torch.corrcoef(F.T) off-diag) ---------
    f_mean = jnp.sum(F, axis=2, keepdims=True) * (1.0 / N)           # (Bb,K,1)
    Fc = F - f_mean
    var = jnp.sum(Fc * Fc, axis=2, keepdims=True)                    # (Bb,K,1)
    Fn = Fc * lax.rsqrt(var + eps)                                   # (Bb,K,N)
    corr = lax.dot_general(Fn, Fn, contract_minor,
                           preferred_element_type=jnp.float32)       # (Bb,K,K)
    corr = jnp.clip(corr, -1.0, 1.0)
    K = corr.shape[-1]
    rows = lax.broadcasted_iota(jnp.int32, (1, K, K), 1)             # built once
    cols = lax.broadcasted_iota(jnp.int32, (1, K, K), 2)
    off = jnp.where(rows == cols, 0.0, corr)
    loss_corr = jnp.sum(jnp.sum(off * off, axis=2), axis=1, keepdims=True)

    block_sum = jnp.sum(loss_r2 + penalty_weight * loss_corr)        # scalar

    sub = lax.broadcasted_iota(jnp.int32, (1, 8, 128), 1)
    lane = lax.broadcasted_iota(jnp.int32, (1, 8, 128), 2)
    out_ref[...] = jnp.where((sub == 0) & (lane == 0), block_sum, 0.0)


def _round_up(x, m):
    return -(-x // m) * m


def _vmem_config():
    """Returns (per-block VMEM budget, vmem_limit_bytes, prefer num_blocks>=2)."""
    kind = ""
    try:
        kind = jax.devices()[0].device_kind.lower()
    except Exception:
        pass
    if "v7" in kind:
        # 64 MiB physical per TensorCore: keep blocks modest, split across TCs.
        return 36 * 1024 * 1024, 48 * 1024 * 1024, True
    if "v5" in kind or "v6" in kind:
        # 128 MiB physical VMEM: raise the scoped limit past the default.
        return 72 * 1024 * 1024, 100 * 1024 * 1024, False
    # Unknown generation / interpret: conservative defaults.
    return 12 * 1024 * 1024, 32 * 1024 * 1024, False


def _pick_block_batches(B, K, TD, N, budget_bytes, prefer_split):
    """Largest Bb dividing B whose padded, double-buffered footprint fits.

    Padding-aware: second-minor dims pad to multiples of 8, minor dims to
    multiples of 128; in-kernel temporaries (G/H/FtFH, centered factors,
    Y*Y-style temps, corr) are counted on top of the double-buffered inputs.
    """
    Kp, TDp, Np = _round_up(K, 8), _round_up(TD, 8), _round_up(N, 128)
    Kl, TDl = _round_up(K, 128), _round_up(TD, 128)
    in_bytes = 4 * ((Kp + TDp) * Np + Kp * Kl)            # F, Y, Inv blocks
    tmp_bytes = 4 * (TDp * Np                              # Y*Y-style temps
                     + 2 * Kp * Np                         # Fc, Fn
                     + 3 * Kp * TDl                        # G, H, FtF@H
                     + 2 * Kp * Kl)                        # FtF, corr
    fixed = 4 * 8 * TDl + 4 * 8 * 128 + (2 << 20)          # w, out tile, slack

    bb_max = B
    if prefer_split and B >= 2:
        bb_max = max(1, B // 2)    # keep >= 2 grid steps for 2-TC sharding
    best = 1
    for cand in range(1, bb_max + 1):
        if B % cand:
            continue
        need = 2 * cand * in_bytes + cand * tmp_bytes + fixed
        if need <= budget_bytes:
            best = cand
    return best


def accumulative_gain_loss(preds, y_ts, importance_weights,
                           value_decay=0.9, penalty_weight=0.1, eps=1e-8):
    preds = preds.astype(jnp.float32)
    y_ts = y_ts.astype(jnp.float32)
    B, N, K = preds.shape
    _, T, _, D = y_ts.shape
    TD = T * D

    # Lane-dense layouts: big N axis goes to the last (128-lane) dimension.
    # allow_input_fusion below lets XLA fold these transposes into the
    # pallas_call input DMA rather than materializing an extra HBM copy.
    preds_t = jnp.transpose(preds, (0, 2, 1))                        # (B, K, N)
    y_lane = jnp.transpose(y_ts, (0, 1, 3, 2)).reshape(B, TD, N)     # (B, TD, N)

    # Glue: tiny K x K matrix inverse has no clean Pallas equivalent.
    # TODO(synk): torch.inverse equivalent stays in plain JAX (jnp.linalg.inv).
    FtF = jnp.einsum('bnk,bnm->bkm', preds, preds)
    inv_FtF = jnp.linalg.inv(
        FtF + eps * jnp.eye(K, dtype=jnp.float32)[None]).astype(jnp.float32)

    imp = jnp.asarray(importance_weights, jnp.float32).reshape(1, D)
    decay = (value_decay ** jnp.arange(T, dtype=jnp.float32)).reshape(T, 1)
    w = (decay * imp).reshape(1, TD)                                  # (1, TD)

    block_budget, vmem_limit, prefer_split = _vmem_config()
    Bb = _pick_block_batches(B, K, TD, N, block_budget, prefer_split)
    num_blocks = B // Bb

    kernel = functools.partial(
        _agl_kernel, N=N, T=T, penalty_weight=penalty_weight, eps=eps)

    out = pl.pallas_call(
        kernel,
        out_shape=jax.ShapeDtypeStruct((num_blocks, 8, 128), jnp.float32),
        grid=(num_blocks,),
        in_specs=[
            pl.BlockSpec((Bb, K, N), lambda i: (i, 0, 0)),
            pl.BlockSpec((Bb, TD, N), lambda i: (i, 0, 0)),
            pl.BlockSpec((Bb, K, K), lambda i: (i, 0, 0)),
            pl.BlockSpec((1, TD), lambda i: (0, 0)),
        ],
        out_specs=pl.BlockSpec((1, 8, 128), lambda i: (i, 0, 0)),
        compiler_params=pltpu.CompilerParams(
            dimension_semantics=("parallel",),
            allow_input_fusion=[True, True, False, False],
            vmem_limit_bytes=vmem_limit),
    )(preds_t, y_lane, inv_FtF, w)

    # Only element [i, 0, 0] of each block tile is non-zero, so summing the
    # whole slab is exact.
    return jnp.sum(out) / B


def reference_loss(preds, y_ts, importance, value_decay, penalty_weight, eps):
    """Pure-JAX reference mirroring the PyTorch forward (compute_metrics=False)."""
    B, N, K = preds.shape
    _, T, _, D = y_ts.shape
    total_r2_loss = jnp.float32(0.0)
    total_corr = jnp.float32(0.0)
    for b in range(B):
        F_b = preds[b]
        FtF = F_b.T @ F_b
        inv_FtF = jnp.linalg.inv(FtF + eps * jnp.eye(K, dtype=jnp.float32))
        pseudo = inv_FtF @ F_b.T
        tot = jnp.float32(0.0)
        for t in range(T):
            wgt = value_decay ** t
            y_t = y_ts[b, t]
            y_hat = F_b @ (pseudo @ y_t)
            ss_res = ((y_t - y_hat) ** 2).sum(0)
            y_mean = y_t.mean(0)
            ss_tot = ((y_t - y_mean) ** 2).sum(0) + eps
            r2 = 1.0 - ss_res / ss_tot
            tot = tot + wgt * (r2 * importance).sum()
        total_r2_loss = total_r2_loss + (-tot / T)
        Fc = F_b - F_b.mean(0, keepdims=True)
        C = Fc.T @ Fc
        d = jnp.sqrt(jnp.diag(C))
        corr = jnp.clip(C / (d[:, None] * d[None, :]), -1.0, 1.0)
        mask = 1.0 - jnp.eye(K, dtype=jnp.float32)
        total_corr = total_corr + ((corr * mask) ** 2).sum()
    return total_r2_loss / B + penalty_weight * total_corr / B


if __name__ == "__main__":
    # Small shapes consistent with the forward: preds [B,N,K], y_ts [B,T,N,D]
    B, N, K, T, D = 2, 16, 4, 8, 3
    value_decay, penalty_weight, eps = 0.9, 0.1, 1e-8
    importance_weights = jnp.array([1.0, 0.0, 0.0], dtype=jnp.float32)  # len D

    key = jax.random.PRNGKey(0)
    k1, k2 = jax.random.split(key)
    preds = jax.random.normal(k1, (B, N, K), dtype=jnp.float32)
    y_ts = jax.random.normal(k2, (B, T, N, D), dtype=jnp.float32)

    loss = accumulative_gain_loss(
        preds, y_ts, importance_weights,
        value_decay=value_decay, penalty_weight=penalty_weight, eps=eps)
    loss = jax.block_until_ready(loss)

    ref = reference_loss(preds, y_ts, importance_weights,
                         value_decay, penalty_weight, eps)
    ref = jax.block_until_ready(ref)

    assert jnp.allclose(loss, ref, rtol=1e-4, atol=1e-4), (loss, ref)
    print("KERNEL_OK")
</pallas_src>

<mosaic_0001>
module attributes {stable_mosaic.version = 11 : i64} {
  func.func @_agl_kernel(%arg0: i32, %arg1: memref<2x4x16xf32, #tpu.memory_space<vmem>>, %arg2: memref<2x24x16xf32, #tpu.memory_space<vmem>>, %arg3: memref<2x4x4xf32, #tpu.memory_space<vmem>>, %arg4: memref<1x24xf32, #tpu.memory_space<vmem>>, %arg5: memref<1x8x128xf32, #tpu.memory_space<vmem>>) attributes {dimension_semantics = [#tpu.dimension_semantics<parallel>], iteration_bounds = array<i64: 1>, scalar_prefetch = 0 : i64, scratch_operands = 0 : i64, tpu.core_type = #tpu.core_type<tc>, window_params = [{transform_indices = @transform_0, window_bounds = array<i64: 2, 4, 16>}, {transform_indices = @transform_1, window_bounds = array<i64: 2, 24, 16>}, {transform_indices = @transform_2, window_bounds = array<i64: 2, 4, 4>}, {pipeline_mode = #tpu.pipeline_mode<synchronous>, transform_indices = @transform_3, window_bounds = array<i64: 1, 24>}, {transform_indices = @transform_4, window_bounds = array<i64: 1, 8, 128>}]} {
    %c0 = arith.constant 0 : index
    %c0_0 = arith.constant 0 : index
    %c0_1 = arith.constant 0 : index
    %0 = vector.load %arg1[%c0, %c0_0, %c0_1] : memref<2x4x16xf32, #tpu.memory_space<vmem>>, vector<2x4x16xf32>
    %c0_2 = arith.constant 0 : index
    %c0_3 = arith.constant 0 : index
    %c0_4 = arith.constant 0 : index
    %1 = vector.load %arg2[%c0_2, %c0_3, %c0_4] : memref<2x24x16xf32, #tpu.memory_space<vmem>>, vector<2x24x16xf32>
    %c0_5 = arith.constant 0 : index
    %c0_6 = arith.constant 0 : index
    %c0_7 = arith.constant 0 : index
    %2 = vector.load %arg3[%c0_5, %c0_6, %c0_7] : memref<2x4x4xf32, #tpu.memory_space<vmem>>, vector<2x4x4xf32>
    %c0_8 = arith.constant 0 : index
    %c0_9 = arith.constant 0 : index
    %3 = vector.load %arg4[%c0_8, %c0_9] : memref<1x24xf32, #tpu.memory_space<vmem>>, vector<1x24xf32>
    %cst = arith.constant dense<0.000000e+00> : vector<2x4x24xf32>
    %4 = tpu.matmul %0, %1, %cst {dimension_numbers = #tpu.dot_dimension_numbers<[2], [2], [1], [1], [0, 0, 0, 1, 1, 1], [0], [0]>} : vector<2x4x16xf32>, vector<2x24x16xf32>, vector<2x4x24xf32> -> vector<2x4x24xf32>
    %cst_10 = arith.constant dense<0.000000e+00> : vector<2x4x4xf32>
    %5 = tpu.matmul %0, %0, %cst_10 {dimension_numbers = #tpu.dot_dimension_numbers<[2], [2], [1], [1], [0, 0, 0, 1, 1, 1], [0], [0]>} : vector<2x4x16xf32>, vector<2x4x16xf32>, vector<2x4x4xf32> -> vector<2x4x4xf32>
    %cst_11 = arith.constant dense<0.000000e+00> : vector<2x4x24xf32>
    %6 = tpu.matmul %2, %4, %cst_11 {dimension_numbers = #tpu.dot_dimension_numbers<[2], [1], [1], [2], [0, 0, 0, 1, 1, 2], [0], [0]>} : vector<2x4x4xf32>, vector<2x4x24xf32>, vector<2x4x24xf32> -> vector<2x4x24xf32>
    %cst_12 = arith.constant dense<0.000000e+00> : vector<2x4x24xf32>
    %7 = tpu.matmul %5, %6, %cst_12 {dimension_numbers = #tpu.dot_dimension_numbers<[2], [1], [1], [2], [0, 0, 0, 1, 1, 2], [0], [0]>} : vector<2x4x4xf32>, vector<2x4x24xf32>, vector<2x4x24xf32> -> vector<2x4x24xf32>
    %cst_13 = arith.constant dense<0.000000e+00> : vector<2x24xf32>
    %8 = vector.multi_reduction <add>, %1, %cst_13 [2] : vector<2x24x16xf32> to vector<2x24xf32>
    %9 = arith.mulf %1, %1 : vector<2x24x16xf32>
    %cst_14 = arith.constant dense<0.000000e+00> : vector<2x24xf32>
    %10 = vector.multi_reduction <add>, %9, %cst_14 [2] : vector<2x24x16xf32> to vector<2x24xf32>
    %11 = arith.mulf %4, %6 : vector<2x4x24xf32>
    %cst_15 = arith.constant dense<0.000000e+00> : vector<2x24xf32>
    %12 = vector.multi_reduction <add>, %11, %cst_15 [1] : vector<2x4x24xf32> to vector<2x24xf32>
    %13 = arith.mulf %6, %7 : vector<2x4x24xf32>
    %cst_16 = arith.constant dense<0.000000e+00> : vector<2x24xf32>
    %14 = vector.multi_reduction <add>, %13, %cst_16 [1] : vector<2x4x24xf32> to vector<2x24xf32>
    %cst_17 = arith.constant 2.000000e+00 : f32
    %15 = vector.broadcast %cst_17 : f32 to vector<2x24xf32>
    %16 = arith.mulf %15, %12 : vector<2x24xf32>
    %17 = arith.subf %10, %16 : vector<2x24xf32>
    %18 = arith.addf %17, %14 : vector<2x24xf32>
    %19 = arith.mulf %8, %8 : vector<2x24xf32>
    %cst_18 = arith.constant 6.250000e-02 : f32
    %20 = vector.broadcast %cst_18 : f32 to vector<2x24xf32>
    %21 = arith.mulf %19, %20 : vector<2x24xf32>
    %22 = arith.subf %10, %21 : vector<2x24xf32>
    %cst_19 = arith.constant 9.99999993E-9 : f32
    %23 = vector.broadcast %cst_19 : f32 to vector<2x24xf32>
    %24 = arith.addf %22, %23 : vector<2x24xf32>
    %25 = tpu.reciprocal %24 {approx = true} : vector<2x24xf32> -> vector<2x24xf32>
    %26 = arith.mulf %24, %25 : vector<2x24xf32>
    %cst_20 = arith.constant 2.000000e+00 : f32
    %27 = vector.broadcast %cst_20 : f32 to vector<2x24xf32>
    %28 = arith.subf %27, %26 : vector<2x24xf32>
    %29 = arith.mulf %25, %28 : vector<2x24xf32>
    %30 = arith.mulf %18, %29 : vector<2x24xf32>
    %cst_21 = arith.constant 1.000000e+00 : f32
    %31 = vector.broadcast %cst_21 : f32 to vector<2x24xf32>
    %32 = arith.subf %31, %30 : vector<2x24xf32>
    %33 = vector.broadcast %3 : vector<1x24xf32> to vector<2x24xf32>
    %34 = arith.mulf %32, %33 : vector<2x24xf32>
    %cst_22 = arith.constant dense<0.000000e+00> : vector<2xf32>
    %35 = vector.multi_reduction <add>, %34, %cst_22 [1] : vector<2x24xf32> to vector<2xf32>
    %36 = vector.shape_cast %35 : vector<2xf32> to vector<2x1xf32>
    %cst_23 = arith.constant 0.000000e+00 : f32
    %37 = vector.broadcast %cst_23 : f32 to vector<2x1xf32>
    %38 = arith.subf %37, %36 : vector<2x1xf32>
    %cst_24 = arith.constant 1.250000e-01 : f32
    %39 = vector.broadcast %cst_24 : f32 to vector<2x1xf32>
    %40 = arith.mulf %38, %39 : vector<2x1xf32>
    %cst_25 = arith.constant dense<0.000000e+00> : vector<2x4xf32>
    %41 = vector.multi_reduction <add>, %0, %cst_25 [2] : vector<2x4x16xf32> to vector<2x4xf32>
    %42 = vector.shape_cast %41 : vector<2x4xf32> to vector<2x4x1xf32>
    %cst_26 = arith.constant 6.250000e-02 : f32
    %43 = vector.broadcast %cst_26 : f32 to vector<2x4x1xf32>
    %44 = arith.mulf %42, %43 : vector<2x4x1xf32>
    %45 = vector.broadcast %44 : vector<2x4x1xf32> to vector<2x4x16xf32>
    %46 = arith.subf %0, %45 : vector<2x4x16xf32>
    %47 = arith.mulf %46, %46 : vector<2x4x16xf32>
    %cst_27 = arith.constant dense<0.000000e+00> : vector<2x4xf32>
    %48 = vector.multi_reduction <add>, %47, %cst_27 [2] : vector<2x4x16xf32> to vector<2x4xf32>
    %49 = vector.shape_cast %48 : vector<2x4xf32> to vector<2x4x1xf32>
    %cst_28 = arith.constant 9.99999993E-9 : f32
    %50 = vector.broadcast %cst_28 : f32 to vector<2x4x1xf32>
    %51 = arith.addf %49, %50 : vector<2x4x1xf32>
    %52 = math.rsqrt %51 : vector<2x4x1xf32>
    %53 = vector.broadcast %52 : vector<2x4x1xf32> to vector<2x4x16xf32>
    %54 = arith.mulf %46, %53 : vector<2x4x16xf32>
    %cst_29 = arith.constant dense<0.000000e+00> : vector<2x4x4xf32>
    %55 = tpu.matmul %54, %54, %cst_29 {dimension_numbers = #tpu.dot_dimension_numbers<[2], [2], [1], [1], [0, 0, 0, 1, 1, 1], [0], [0]>} : vector<2x4x16xf32>, vector<2x4x16xf32>, vector<2x4x4xf32> -> vector<2x4x4xf32>
    %cst_30 = arith.constant -1.000000e+00 : f32
    %cst_31 = arith.constant 1.000000e+00 : f32
    %56 = vector.broadcast %cst_30 : f32 to vector<2x4x4xf32>
    %57 = arith.maximumf %56, %55 : vector<2x4x4xf32>
    %58 = vector.broadcast %cst_31 : f32 to vector<2x4x4xf32>
    %59 = arith.minimumf %58, %57 : vector<2x4x4xf32>
    %60 = tpu.iota {dimensions = array<i32: 1>} : vector<1x4x4xi32>
    %61 = tpu.iota {dimensions = array<i32: 2>} : vector<1x4x4xi32>
    %62 = arith.cmpi eq, %60, %61 : vector<1x4x4xi32>
    %cst_32 = arith.constant 0.000000e+00 : f32
    %63 = vector.shape_cast %62 : vector<1x4x4xi1> to vector<1x4x4xi1>
    %64 = vector.broadcast %63 : vector<1x4x4xi1> to vector<2x4x4xi1>
    %65 = vector.broadcast %cst_32 : f32 to vector<2x4x4xf32>
    %66 = arith.select %64, %65, %59 : vector<2x4x4xi1>, vector<2x4x4xf32>
    %67 = arith.mulf %66, %66 : vector<2x4x4xf32>
    %cst_33 = arith.constant dense<0.000000e+00> : vector<2x4xf32>
    %68 = vector.multi_reduction <add>, %67, %cst_33 [2] : vector<2x4x4xf32> to vector<2x4xf32>
    %cst_34 = arith.constant dense<0.000000e+00> : vector<2xf32>
    %69 = vector.multi_reduction <add>, %68, %cst_34 [1] : vector<2x4xf32> to vector<2xf32>
    %70 = vector.shape_cast %69 : vector<2xf32> to vector<2x1xf32>
    %cst_35 = arith.constant 1.000000e-01 : f32
    %71 = vector.broadcast %cst_35 : f32 to vector<2x1xf32>
    %72 = arith.mulf %71, %70 : vector<2x1xf32>
    %73 = arith.addf %40, %72 : vector<2x1xf32>
    %74 = vector.shape_cast %73 : vector<2x1xf32> to vector<1x2x1xf32>
    %cst_36 = arith.constant dense<0.000000e+00> : vector<1xf32>
    %75 = vector.multi_reduction <add>, %74, %cst_36 [1, 2] : vector<1x2x1xf32> to vector<1xf32>
    %76 = vector.shape_cast %75 : vector<1xf32> to vector<1x1x1xf32>
    %77 = vector.extract %76[0, 0, 0] : f32 from vector<1x1x1xf32>
    %78 = tpu.iota {dimensions = array<i32: 1>} : vector<1x8x128xi32>
    %79 = tpu.iota {dimensions = array<i32: 2>} : vector<1x8x128xi32>
    %c0_i32 = arith.constant 0 : i32
    %80 = vector.broadcast %c0_i32 : i32 to vector<1x8x128xi32>
    %81 = arith.cmpi eq, %78, %80 : vector<1x8x128xi32>
    %c0_i32_37 = arith.constant 0 : i32
    %82 = vector.broadcast %c0_i32_37 : i32 to vector<1x8x128xi32>
    %83 = arith.cmpi eq, %79, %82 : vector<1x8x128xi32>
    %84 = arith.andi %81, %83 : vector<1x8x128xi1>
    %cst_38 = arith.constant 0.000000e+00 : f32
    %85 = vector.broadcast %77 : f32 to vector<1x8x128xf32>
    %86 = vector.broadcast %cst_38 : f32 to vector<1x8x128xf32>
    %87 = arith.select %84, %85, %86 : vector<1x8x128xi1>, vector<1x8x128xf32>
    %c0_39 = arith.constant 0 : index
    %c0_40 = arith.constant 0 : index
    %c0_41 = arith.constant 0 : index
    %88 = vector.load %arg5[%c0_39, %c0_40, %c0_41] : memref<1x8x128xf32, #tpu.memory_space<vmem>>, vector<1x8x128xf32>
    tpu.vector_store %arg5[%c0_39, %c0_40, %c0_41], %87 {strides = array<i32>} : memref<1x8x128xf32, #tpu.memory_space<vmem>>, vector<1x8x128xf32>,
    return
  }
  func.func @transform_0(%arg0: i32) -> (i32, i32, i32) {
    %c0_i32 = arith.constant 0 : i32
    %c0_i32_0 = arith.constant 0 : i32
    %c0_i32_1 = arith.constant 0 : i32
    return %arg0, %c0_i32, %c0_i32_0 : i32, i32, i32
  }
  func.func @transform_1(%arg0: i32) -> (i32, i32, i32) {
    %c0_i32 = arith.constant 0 : i32
    %c0_i32_0 = arith.constant 0 : i32
    %c0_i32_1 = arith.constant 0 : i32
    return %arg0, %c0_i32, %c0_i32_0 : i32, i32, i32
  }
  func.func @transform_2(%arg0: i32) -> (i32, i32, i32) {
    %c0_i32 = arith.constant 0 : i32
    %c0_i32_0 = arith.constant 0 : i32
    %c0_i32_1 = arith.constant 0 : i32
    return %arg0, %c0_i32, %c0_i32_0 : i32, i32, i32
  }
  func.func @transform_3(%arg0: i32) -> (i32, i32) {
    %c0_i32 = arith.constant 0 : i32
    %c0_i32_0 = arith.constant 0 : i32
    %c0_i32_1 = arith.constant 0 : i32
    return %c0_i32, %c0_i32_0 : i32, i32
  }
  func.func @transform_4(%arg0: i32) -> (i32, i32, i32) {
    %c0_i32 = arith.constant 0 : i32
    %c0_i32_0 = arith.constant 0 : i32
    %c0_i32_1 = arith.constant 0 : i32
    return %arg0, %c0_i32, %c0_i32_0 : i32, i32, i32
  }
}

</mosaic_0001>

<llo_original>
// kernel: tpu_custom_call.1
$region0: #{tpu_custom_call.1}
  #allocation0 [shape = 'u32[]', space=smem, size = 0x4, offset = 0x4, fixed_abs, tag = 'smem constant byte address 0x4 - core index']
  #allocation1 [shape = 'u32[72,128]{1,0:T(1,128)}', space=vmem, size = 0x9000, scoped, tag = 'internal scratch']
  %s0 = inlined_call_operand.vmem [shape: f32[2,4,16], index: 0, kind: input, shape index: {}]
  %s1 = inlined_call_operand.vmem [shape: f32[2,24,16], index: 1, kind: input, shape index: {}]
  %s2 = inlined_call_operand.vmem [shape: f32[2,4,4], index: 2, kind: input, shape index: {}]
  %s3 = inlined_call_operand.vmem [shape: f32[1,24], index: 3, kind: input, shape index: {}]
  %s4 = inlined_call_operand.hbm [shape: f32[1,8,128], index: 4, kind: output, shape index: {}]
  %s5 = sld [smem:[#allocation0]]
  $region26: #{tpu_custom_call.1} parent=0
    _
  %s7 = ssub.s32 1, %s5
  %s8 = scalar_select 0, %s7, %s5
  $region1: #{tpu_custom_call.1} parent=0
    #allocation2 [shape = 'u8[4096]{0}', space=vmem, size = 0x1000, scoped, tag = 'output window, operand 0, single buffered']
    #allocation3 [shape = 's32[1]{0}', space=sflag, size = 0x4, scoped, tag = 'scoped memory for tpu_custom_call.1']
    %9 = vsyncpa [#allocation3], 0
    // Predicated region
    $region2: #{tpu_custom_call.1} parent=1 // pred_check
      _
    $region3: #{tpu_custom_call.1} parent=1 // pred_check_branch
      %11 = sbr.rel (0) target = $region5
    $region4: #{tpu_custom_call.1} parent=1 // pred_region
      _
    $region5: #{tpu_custom_call.1} parent=1 // pred_fallthru
      _
    // Predicated region
    $region6: #{tpu_custom_call.1} parent=1 // pred_check
      _
    $region7: #{tpu_custom_call.1} parent=1 // pred_check_branch
      %13 = sbr.rel (0) target = $region9
    $region8: #{tpu_custom_call.1} parent=1 // pred_region
      _
    $region9: #{tpu_custom_call.1} parent=1 // pred_fallthru
      _
    // Predicated region
    $region10: #{tpu_custom_call.1} parent=1 // pred_check
      _
    $region11: #{tpu_custom_call.1} parent=1 // pred_check_branch
      %15 = sbr.rel (0) target = $region13
    $region12: #{tpu_custom_call.1} parent=1 // pred_region
      _
    $region13: #{tpu_custom_call.1} parent=1 // pred_fallthru
      _
    // Predicated region
    $region14: #{tpu_custom_call.1} parent=1 // pred_check
      _
    $region15: #{tpu_custom_call.1} parent=1 // pred_check_branch
      %17 = sbr.rel (0) target = $region17
    $region16: #{tpu_custom_call.1} parent=1 // pred_region
      _
    $region17: #{tpu_custom_call.1} parent=1 // pred_fallthru
      _
    %v18 = vld [vmem:[%s0] sm:$0xf]
    %v19 = vld [vmem:[%s0 + $0x4] sm:$0xf]
    %v20 = vld [vmem:[%s1] sm:$0xff]
    %v21 = vld [vmem:[%s1 + $0x8] sm:$0xff]
    %v22 = vld [vmem:[%s1 + $0x10] sm:$0xff]
    %v23 = vld [vmem:[%s1 + $0x18] sm:$0xff]
    %v24 = vld [vmem:[%s1 + $0x20] sm:$0xff]
    %v25 = vld [vmem:[%s1 + $0x28] sm:$0xff]
    %v26 = vld [vmem:[%s2] sm:$0xf]
    %v27 = vld [vmem:[%s2 + $0x4] sm:$0xf]
    %v28 = vld [vmem:[%s3] sm:$0x1]
    %vm29 = vcmask 130048
    %v31 = vsel %vm29, %v18, 0
    %v34 = vsel %vm29, %v20, 0
    %v37 = vsel %vm29, %v21, 0
    %v40 = vsel %vm29, %v22, 0
    %42 = vmatpush.xpose.msra.mxu0 0.0
    %43 = vmatpush.xpose.msra.mxu0 0.0
    %44 = vmatpush.xpose.msra.mxu0 0.0
    %45 = vmatpush.xpose.msra.mxu0 0.0
    %46 = vmatpush.xpose.msra.mxu0 0.0
    %47 = vmatpush.xpose.msra.mxu0 0.0
    %48 = vmatpush.xpose.msra.mxu0 0.0
    %49 = vmatpush.xpose.msra.mxu0 0.0
    %50 = vmatpush.xpose.msra.mxu0 0.0
    %51 = vmatpush.xpose.msra.mxu0 0.0
    %52 = vmatpush.xpose.msra.mxu0 0.0
    %53 = vmatpush.xpose.msra.mxu0 0.0
    %54 = vmatpush.xpose.msra.mxu0 0.0
    %55 = vmatpush.xpose.msra.mxu0 %v40
    %56 = vmatpush.xpose.msra.mxu0 %v37
    %57 = vmatpush.xpose.msra.mxu0 %v34
    %58 = vmatmul.f32.gmra.mxu0 %v31
    %v59 = vpop.f32.mrf.mxu0
    %v60 = vadd.f32 0.0, %v59
    %61 = vdwg.mxu0
    %v63 = vsel %vm29, %v19, 0
    %v66 = vsel %vm29, %v23, 0
    %v69 = vsel %vm29, %v24, 0
    %v72 = vsel %vm29, %v25, 0
    %74 = vmatpush.xpose.msra.mxu0 0.0
    %75 = vmatpush.xpose.msra.mxu0 0.0
    %76 = vmatpush.xpose.msra.mxu0 0.0
    %77 = vmatpush.xpose.msra.mxu0 0.0
    %78 = vmatpush.xpose.msra.mxu0 0.0
    %79 = vmatpush.xpose.msra.mxu0 0.0
    %80 = vmatpush.xpose.msra.mxu0 0.0
    %81 = vmatpush.xpose.msra.mxu0 0.0
    %82 = vmatpush.xpose.msra.mxu0 0.0
    %83 = vmatpush.xpose.msra.mxu0 0.0
    %84 = vmatpush.xpose.msra.mxu0 0.0
    %85 = vmatpush.xpose.msra.mxu0 0.0
    %86 = vmatpush.xpose.msra.mxu0 0.0
    %87 = vmatpush.xpose.msra.mxu0 %v72
    %88 = vmatpush.xpose.msra.mxu0 %v69
    %89 = vmatpush.xpose.msra.mxu0 %v66
    %90 = vmatmul.f32.gmra.mxu0 %v63
    %v91 = vpop.f32.mrf.mxu0
    %v92 = vadd.f32 0.0, %v91
    %93 = vdwg.mxu0
    %94 = vmatpush.xpose.msra.mxu0 0.0
    %95 = vmatpush.xpose.msra.mxu0 0.0
    %96 = vmatpush.xpose.msra.mxu0 0.0
    %97 = vmatpush.xpose.msra.mxu0 0.0
    %98 = vmatpush.xpose.msra.mxu0 0.0
    %99 = vmatpush.xpose.msra.mxu0 0.0
    %100 = vmatpush.xpose.msra.mxu0 0.0
    %101 = vmatpush.xpose.msra.mxu0 0.0
    %102 = vmatpush.xpose.msra.mxu0 0.0
    %103 = vmatpush.xpose.msra.mxu0 0.0
    %104 = vmatpush.xpose.msra.mxu0 0.0
    %105 = vmatpush.xpose.msra.mxu0 0.0
    %106 = vmatpush.xpose.msra.mxu0 0.0
    %107 = vmatpush.xpose.msra.mxu0 0.0
    %108 = vmatpush.xpose.msra.mxu0 0.0
    %109 = vmatpush.xpose.msra.mxu0 %v31
    %110 = vmatmul.f32.gmra.mxu0 %v31
    %v111 = vpop.f32.mrf.mxu0
    %v112 = vadd.f32 0.0, %v111
    %113 = vdwg.mxu0
    %114 = vmatpush.xpose.msra.mxu0 0.0
    %115 = vmatpush.xpose.msra.mxu0 0.0
    %116 = vmatpush.xpose.msra.mxu0 0.0
    %117 = vmatpush.xpose.msra.mxu0 0.0
    %118 = vmatpush.xpose.msra.mxu0 0.0
    %119 = vmatpush.xpose.msra.mxu0 0.0
    %120 = vmatpush.xpose.msra.mxu0 0.0
    %121 = vmatpush.xpose.msra.mxu0 0.0
    %122 = vmatpush.xpose.msra.mxu0 0.0
    %123 = vmatpush.xpose.msra.mxu0 0.0
    %124 = vmatpush.xpose.msra.mxu0 0.0
    %125 = vmatpush.xpose.msra.mxu0 0.0
    %126 = vmatpush.xpose.msra.mxu0 0.0
    %127 = vmatpush.xpose.msra.mxu0 0.0
    %128 = vmatpush.xpose.msra.mxu0 0.0
    %129 = vmatpush.xpose.msra.mxu0 %v63
    %130 = vmatmul.f32.gmra.mxu0 %v63
    %v131 = vpop.f32.mrf.mxu0
    %v132 = vadd.f32 0.0, %v131
    %133 = vdwg.mxu0
    %vm134 = vcmask 31744
    %v136 = vsel %vm134, %v26, 0
    %vm138 = vcmask 1043456
    %v140 = vsel %vm138, %v60, 0
    %142 = vmatpush.msra.mxu0 0.0
    %143 = vmatpush.msra.mxu0 0.0
    %144 = vmatpush.msra.mxu0 0.0
    %145 = vmatpush.msra.mxu0 0.0
    %146 = vmatpush.msra.mxu0 0.0
    %147 = vmatpush.msra.mxu0 0.0
    %148 = vmatpush.msra.mxu0 0.0
    %149 = vmatpush.msra.mxu0 0.0
    %150 = vmatpush.msra.mxu0 0.0
    %151 = vmatpush.msra.mxu0 0.0
    %152 = vmatpush.msra.mxu0 0.0
    %153 = vmatpush.msra.mxu0 0.0
    %154 = vmatpush.msra.mxu0 0.0
    %155 = vmatpush.msra.mxu0 0.0
    %156 = vmatpush.msra.mxu0 0.0
    %157 = vmatpush.msra.mxu0 %v140
    %158 = vmatmul.f32.gmra.mxu0 %v136
    %v159 = vpop.f32.mrf.mxu0
    %v160 = vadd.f32 0.0, %v159
    %161 = vdwg.mxu0
    %v163 = vsel %vm134, %v27, 0
    %v166 = vsel %vm138, %v92, 0
    %168 = vmatpush.msra.mxu0 0.0
    %169 = vmatpush.msra.mxu0 0.0
    %170 = vmatpush.msra.mxu0 0.0
    %171 = vmatpush.msra.mxu0 0.0
    %172 = vmatpush.msra.mxu0 0.0
    %173 = vmatpush.msra.mxu0 0.0
    %174 = vmatpush.msra.mxu0 0.0
    %175 = vmatpush.msra.mxu0 0.0
    %176 = vmatpush.msra.mxu0 0.0
    %177 = vmatpush.msra.mxu0 0.0
    %178 = vmatpush.msra.mxu0 0.0
    %179 = vmatpush.msra.mxu0 0.0
    %180 = vmatpush.msra.mxu0 0.0
    %181 = vmatpush.msra.mxu0 0.0
    %182 = vmatpush.msra.mxu0 0.0
    %183 = vmatpush.msra.mxu0 %v166
    %184 = vmatmul.f32.gmra.mxu0 %v163
    %v185 = vpop.f32.mrf.mxu0
    %v186 = vadd.f32 0.0, %v185
    %187 = vdwg.mxu0
    %v189 = vsel %vm134, %v112, 0
    %v192 = vsel %vm138, %v160, 0
    %194 = vmatpush.msra.mxu0 0.0
    %195 = vmatpush.msra.mxu0 0.0
    %196 = vmatpush.msra.mxu0 0.0
    %197 = vmatpush.msra.mxu0 0.0
    %198 = vmatpush.msra.mxu0 0.0
    %199 = vmatpush.msra.mxu0 0.0
    %200 = vmatpush.msra.mxu0 0.0
    %201 = vmatpush.msra.mxu0 0.0
    %202 = vmatpush.msra.mxu0 0.0
    %203 = vmatpush.msra.mxu0 0.0
    %204 = vmatpush.msra.mxu0 0.0
    %205 = vmatpush.msra.mxu0 0.0
    %206 = vmatpush.msra.mxu0 0.0
    %207 = vmatpush.msra.mxu0 0.0
    %208 = vmatpush.msra.mxu0 0.0
    %209 = vmatpush.msra.mxu0 %v192
    %210 = vmatmul.f32.gmra.mxu0 %v189
    %v211 = vpop.f32.mrf.mxu0
    %v212 = vadd.f32 0.0, %v211
    %213 = vdwg.mxu0
    %v215 = vsel %vm134, %v132, 0
    %v218 = vsel %vm138, %v186, 0
    %220 = vmatpush.msra.mxu0 0.0
    %221 = vmatpush.msra.mxu0 0.0
    %222 = vmatpush.msra.mxu0 0.0
    %223 = vmatpush.msra.mxu0 0.0
    %224 = vmatpush.msra.mxu0 0.0
    %225 = vmatpush.msra.mxu0 0.0
    %226 = vmatpush.msra.mxu0 0.0
    %227 = vmatpush.msra.mxu0 0.0
    %228 = vmatpush.msra.mxu0 0.0
    %229 = vmatpush.msra.mxu0 0.0
    %230 = vmatpush.msra.mxu0 0.0
    %231 = vmatpush.msra.mxu0 0.0
    %232 = vmatpush.msra.mxu0 0.0
    %233 = vmatpush.msra.mxu0 0.0
    %234 = vmatpush.msra.mxu0 0.0
    %235 = vmatpush.msra.mxu0 %v218
    %236 = vmatmul.f32.gmra.mxu0 %v215
    %v237 = vpop.f32.mrf.mxu0
    %v238 = vadd.f32 0.0, %v237
    %239 = vdwg.mxu0
    %v240 = vsel %vm29, %v20, 0.0
    %241 = vadd.xlane.f32.xlu0 %v240
    %v242 = vpop.xlane.xlu0 %241
    %v243 = vsel %vm29, %v21, 0.0
    %244 = vadd.xlane.f32.xlu0 %v243
    %v245 = vpop.xlane.xlu0 %244
    %v246 = vsel %vm29, %v22, 0.0
    %247 = vadd.xlane.f32.xlu0 %v246
    %v248 = vpop.xlane.xlu0 %247
    %v249 = vsel %vm29, %v23, 0.0
    %250 = vadd.xlane.f32.xlu0 %v249
    %v251 = vpop.xlane.xlu0 %250
    %v252 = vsel %vm29, %v24, 0.0
    %253 = vadd.xlane.f32.xlu0 %v252
    %v254 = vpop.xlane.xlu0 %253
    %v255 = vsel %vm29, %v25, 0.0
    %256 = vadd.xlane.f32.xlu0 %v255
    %v257 = vpop.xlane.xlu0 %256
    %v258 = vmul.f32 %v20, %v20
    %v259 = vmul.f32 %v21, %v21
    %v260 = vmul.f32 %v22, %v22
    %v261 = vmul.f32 %v23, %v23
    %v262 = vmul.f32 %v24, %v24
    %v263 = vmul.f32 %v25, %v25
    %v264 = vsel %vm29, %v258, 0.0
    %265 = vadd.xlane.f32.xlu0 %v264
    %v266 = vpop.xlane.xlu0 %265
    %v267 = vsel %vm29, %v259, 0.0
    %268 = vadd.xlane.f32.xlu0 %v267
    %v269 = vpop.xlane.xlu0 %268
    %v270 = vsel %vm29, %v260, 0.0
    %271 = vadd.xlane.f32.xlu0 %v270
    %v272 = vpop.xlane.xlu0 %271
    %v273 = vsel %vm29, %v261, 0.0
    %274 = vadd.xlane.f32.xlu0 %v273
    %v275 = vpop.xlane.xlu0 %274
    %v276 = vsel %vm29, %v262, 0.0
    %277 = vadd.xlane.f32.xlu0 %v276
    %v278 = vpop.xlane.xlu0 %277
    %v279 = vsel %vm29, %v263, 0.0
    %280 = vadd.xlane.f32.xlu0 %v279
    %v281 = vpop.xlane.xlu0 %280
    %v282 = vmul.f32 %v60, %v160
    %v283 = vmul.f32 %v92, %v186
    %vm284 = vcmask 191488
    %v285 = vsel %vm284, %v282, 0.0
    %v286 = vrot.slane %v285, 4
    %v287 = vadd.f32 %v285, %v286
    %v288 = vrot.slane %v287, 2
    %v289 = vadd.f32 %v287, %v288
    %v290 = vrot.slane %v289, 1
    %v291 = vadd.f32 %v289, %v290
    %v292 = vsel %vm284, %v283, 0.0
    %v293 = vrot.slane %v292, 4
    %v294 = vadd.f32 %v292, %v293
    %v295 = vrot.slane %v294, 2
    %v296 = vadd.f32 %v294, %v295
    %v297 = vrot.slane %v296, 1
    %v298 = vadd.f32 %v296, %v297
    %v299 = vmul.f32 %v160, %v212
    %v300 = vmul.f32 %v186, %v238
    %v301 = vsel %vm284, %v299, 0.0
    %v302 = vrot.slane %v301, 4
    %v303 = vadd.f32 %v301, %v302
    %v304 = vrot.slane %v303, 2
    %v305 = vadd.f32 %v303, %v304
    %v306 = vrot.slane %v305, 1
    %v307 = vadd.f32 %v305, %v306
    %v308 = vsel %vm284, %v300, 0.0
    %v309 = vrot.slane %v308, 4
    %v310 = vadd.f32 %v308, %v309
    %v311 = vrot.slane %v310, 2
    %v312 = vadd.f32 %v310, %v311
    %v313 = vrot.slane %v312, 1
    %v314 = vadd.f32 %v312, %v313
    %v315 = vmul.f32 %v291, 2.0
    %v316 = vmul.f32 %v298, 2.0
    %v319 = vlaneseq
    %v320 = vshrl.u32 %v319, 7
    %322 = vset.pattern.permute.xlu0 %v320
    %323 = vperm.xlu0 %322, %v315
    %v324 = vpop.permute.xlu0 %323
    %v325 = vlaneseq
    %v326 = vshrl.u32 %v325, 7
    %v327 = vadd.s32 %v326, 8
    %328 = vset.pattern.permute.xlu0 %v327
    %329 = vperm.xlu0 %328, %v315
    %v330 = vpop.permute.xlu0 %329
    %v331 = vlaneseq
    %v332 = vshrl.u32 %v331, 7
    %v333 = vadd.s32 %v332, 16
    %334 = vset.pattern.permute.xlu0 %v333
    %335 = vperm.xlu0 %334, %v315
    %v336 = vpop.permute.xlu0 %335
    %v337 = vlaneseq
    %v338 = vshrl.u32 %v337, 7
    %340 = vset.pattern.permute.xlu0 %v338
    %341 = vperm.xlu0 %340, %v316
    %v342 = vpop.permute.xlu0 %341
    %v343 = vlaneseq
    %v344 = vshrl.u32 %v343, 7
    %v345 = vadd.s32 %v344, 8
    %346 = vset.pattern.permute.xlu0 %v345
    %347 = vperm.xlu0 %346, %v316
    %v348 = vpop.permute.xlu0 %347
    %v349 = vlaneseq
    %v350 = vshrl.u32 %v349, 7
    %v351 = vadd.s32 %v350, 16
    %352 = vset.pattern.permute.xlu0 %v351
    %353 = vperm.xlu0 %352, %v316
    %v354 = vpop.permute.xlu0 %353
    %v361 = vsub.f32 %v266, %v324
    %v362 = vsub.f32 %v269, %v330
    %v363 = vsub.f32 %v272, %v336
    %v364 = vsub.f32 %v275, %v342
    %v365 = vsub.f32 %v278, %v348
    %v366 = vsub.f32 %v281, %v354
    %v369 = vlaneseq
    %v370 = vshrl.u32 %v369, 7
    %372 = vset.pattern.permute.xlu0 %v370
    %373 = vperm.xlu0 %372, %v307
    %v374 = vpop.permute.xlu0 %373
    %v375 = vlaneseq
    %v376 = vshrl.u32 %v375, 7
    %v377 = vadd.s32 %v376, 8
    %378 = vset.pattern.permute.xlu0 %v377
    %379 = vperm.xlu0 %378, %v307
    %v380 = vpop.permute.xlu0 %379
    %v381 = vlaneseq
    %v382 = vshrl.u32 %v381, 7
    %v383 = vadd.s32 %v382, 16
    %384 = vset.pattern.permute.xlu0 %v383
    %385 = vperm.xlu0 %384, %v307
    %v386 = vpop.permute.xlu0 %385
    %v387 = vlaneseq
    %v388 = vshrl.u32 %v387, 7
    %390 = vset.pattern.permute.xlu0 %v388
    %391 = vperm.xlu0 %390, %v314
    %v392 = vpop.permute.xlu0 %391
    %v393 = vlaneseq
    %v394 = vshrl.u32 %v393, 7
    %v395 = vadd.s32 %v394, 8
    %396 = vset.pattern.permute.xlu0 %v395
    %397 = vperm.xlu0 %396, %v314
    %v398 = vpop.permute.xlu0 %397
    %v399 = vlaneseq
    %v400 = vshrl.u32 %v399, 7
    %v401 = vadd.s32 %v400, 16
    %402 = vset.pattern.permute.xlu0 %v401
    %403 = vperm.xlu0 %402, %v314
    %v404 = vpop.permute.xlu0 %403
    %v411 = vadd.f32 %v361, %v374
    %v412 = vadd.f32 %v362, %v380
    %v413 = vadd.f32 %v363, %v386
    %v414 = vadd.f32 %v364, %v392
    %v415 = vadd.f32 %v365, %v398
    %v416 = vadd.f32 %v366, %v404
    %v417 = vmul.f32 %v242, %v242
    %v418 = vmul.f32 %v245, %v245
    %v419 = vmul.f32 %v248, %v248
    %v420 = vmul.f32 %v251, %v251
    %v421 = vmul.f32 %v254, %v254
    %v422 = vmul.f32 %v257, %v257
    %v423 = vmul.f32 %v417, 0.0625
    %v424 = vmul.f32 %v418, 0.0625
    %v425 = vmul.f32 %v419, 0.0625
    %v426 = vmul.f32 %v420, 0.0625
    %v427 = vmul.f32 %v421, 0.0625
    %v428 = vmul.f32 %v422, 0.0625
    %v429 = vsub.f32 %v266, %v423
    %v430 = vsub.f32 %v269, %v424
    %v431 = vsub.f32 %v272, %v425
    %v432 = vsub.f32 %v275, %v426
    %v433 = vsub.f32 %v278, %v427
    %v434 = vsub.f32 %v281, %v428
    %v435 = vadd.f32 %v429, 1e-08
    %v436 = vadd.f32 %v430, 1e-08
    %v437 = vadd.f32 %v431, 1e-08
    %v438 = vadd.f32 %v432, 1e-08
    %v439 = vadd.f32 %v433, 1e-08
    %v440 = vadd.f32 %v434, 1e-08
    %v441 = vrcp.pop %v435
    %v442 = vrcp.pop %v436
    %v443 = vrcp.pop %v437
    %v444 = vrcp.pop %v438
    %v445 = vrcp.pop %v439
    %v446 = vrcp.pop %v440
    %v447 = vmul.f32 %v435, %v441
    %v448 = vmul.f32 %v436, %v442
    %v449 = vmul.f32 %v437, %v443
    %v450 = vmul.f32 %v438, %v444
    %v451 = vmul.f32 %v439, %v445
    %v452 = vmul.f32 %v440, %v446
    %v453 = vsub.f32 2.0, %v447
    %v454 = vsub.f32 2.0, %v448
    %v455 = vsub.f32 2.0, %v449
    %v456 = vsub.f32 2.0, %v450
    %v457 = vsub.f32 2.0, %v451
    %v458 = vsub.f32 2.0, %v452
    %v459 = vmul.f32 %v441, %v453
    %v460 = vmul.f32 %v442, %v454
    %v461 = vmul.f32 %v443, %v455
    %v462 = vmul.f32 %v444, %v456
    %v463 = vmul.f32 %v445, %v457
    %v464 = vmul.f32 %v446, %v458
    %v465 = vmul.f32 %v411, %v459
    %v466 = vmul.f32 %v412, %v460
    %v467 = vmul.f32 %v413, %v461
    %v468 = vmul.f32 %v414, %v462
    %v469 = vmul.f32 %v415, %v463
    %v470 = vmul.f32 %v416, %v464
    %v471 = vsub.f32 1.0, %v465
    %v472 = vsub.f32 1.0, %v466
    %v473 = vsub.f32 1.0, %v467
    %v474 = vsub.f32 1.0, %v468
    %v475 = vsub.f32 1.0, %v469
    %v476 = vsub.f32 1.0, %v470
    %v478 = vperm.slane %v28, 0
    %v479 = vlaneseq
    %v480 = vshrl.u32 %v479, 7
    %482 = vset.pattern.permute.xlu0 %v480
    %483 = vperm.xlu0 %482, %v478
    %v484 = vpop.permute.xlu0 %483
    %v485 = vlaneseq
    %v486 = vshrl.u32 %v485, 7
    %v487 = vadd.s32 %v486, 8
    %488 = vset.pattern.permute.xlu0 %v487
    %489 = vperm.xlu0 %488, %v478
    %v490 = vpop.permute.xlu0 %489
    %v491 = vlaneseq
    %v492 = vshrl.u32 %v491, 7
    %v493 = vadd.s32 %v492, 16
    %494 = vset.pattern.permute.xlu0 %v493
    %495 = vperm.xlu0 %494, %v478
    %v496 = vpop.permute.xlu0 %495
    %v500 = vmul.f32 %v471, %v484
    %v501 = vmul.f32 %v472, %v490
    %v502 = vmul.f32 %v473, %v496
    %v503 = vmul.f32 %v474, %v484
    %v504 = vmul.f32 %v475, %v490
    %v505 = vmul.f32 %v476, %v496
    %512 = vset.pattern.permute.xlu0 0
    %513 = vperm.xlu0 %512, %v500
    %v514 = vpop.permute.xlu0 %513
    %515 = vset.pattern.permute.xlu0 0
    %516 = vperm.xlu0 %515, %v501
    %v517 = vpop.permute.xlu0 %516
    %518 = vset.pattern.permute.xlu0 0
    %519 = vperm.xlu0 %518, %v502
    %v520 = vpop.permute.xlu0 %519
    %521 = vset.pattern.permute.xlu0 0
    %522 = vperm.xlu0 %521, %v503
    %v523 = vpop.permute.xlu0 %522
    %524 = vset.pattern.permute.xlu0 0
    %525 = vperm.xlu0 %524, %v504
    %v526 = vpop.permute.xlu0 %525
    %527 = vset.pattern.permute.xlu0 0
    %528 = vperm.xlu0 %527, %v505
    %v529 = vpop.permute.xlu0 %528
    %v530 = vlaneseq
    %v531 = vand.u32 %v530, 127
    %v532 = vperm.slane %v514, %v531
    %v533 = vadd.s32 %v531, 4294967288
    %v534 = vperm.slane %v517, %v533
    %vm535 = vcmask 130112
    %v536 = vsel %vm535, %v534, %v532
    %v537 = vadd.s32 %v531, 4294967280
    %v538 = vperm.slane %v520, %v537
    %vm539 = vcmask 195712
    %v540 = vsel %vm539, %v538, %v536
    %v541 = vperm.slane %v523, %v531
    %v542 = vperm.slane %v526, %v533
    %v543 = vsel %vm535, %v542, %v541
    %v544 = vperm.slane %v529, %v537
    %v545 = vsel %vm539, %v544, %v543
    %vm546 = vcmask 1041409
    %v547 = vsel %vm546, %v545, %v540
    %vm549 = vcmask 189440
    %v550 = vsel %vm549, %v547, 0.0
    %551 = vadd.xlane.f32.xlu0 %v550
    %v552 = vpop.xlane.xlu0 %551
    %v553 = vsub.f32 0.0, %v552
    %v554 = vmul.f32 %v553, 0.125
    %vm555 = vcmask 125952
    %v556 = vsel %vm555, %v18, 0.0
    %557 = vadd.xlane.f32.xlu0 %v556
    %v558 = vpop.xlane.xlu0 %557
    %v559 = vsel %vm555, %v19, 0.0
    %560 = vadd.xlane.f32.xlu0 %v559
    %v561 = vpop.xlane.xlu0 %560
    %v562 = vmul.f32 %v558, 0.0625
    %v563 = vmul.f32 %v561, 0.0625
    %v564 = vsub.f32 %v18, %v562
    %v565 = vsub.f32 %v19, %v563
    %v566 = vmul.f32 %v564, %v564
    %v567 = vmul.f32 %v565, %v565
    %v568 = vsel %vm555, %v566, 0.0
    %569 = vadd.xlane.f32.xlu0 %v568
    %v570 = vpop.xlane.xlu0 %569
    %v571 = vsel %vm555, %v567, 0.0
    %572 = vadd.xlane.f32.xlu0 %v571
    %v573 = vpop.xlane.xlu0 %572
    %v574 = vadd.f32 %v570, 1e-08
    %v575 = vadd.f32 %v573, 1e-08
    %v576 = vrsqrt.pop %v574
    %v577 = vmul.f32 %v576, %v574
    %v578 = vmul.f32 %v577, %v576
    %v579 = vmul.f32 0.5, %v578
    %v580 = vsub.f32 1.5, %v579
    %v581 = vmul.f32 %v576, %v580
    %vm582 = vweird.f32 %v574
    %vm583 = vweird.f32 %v576
    %vm584 = vmor %vm582, %vm583
    %v585 = vsel %vm584, %v576, %v581
    %v586 = vrsqrt.pop %v575
    %v587 = vmul.f32 %v586, %v575
    %v588 = vmul.f32 %v587, %v586
    %v589 = vmul.f32 0.5, %v588
    %v590 = vsub.f32 1.5, %v589
    %v591 = vmul.f32 %v586, %v590
    %vm592 = vweird.f32 %v575
    %vm593 = vweird.f32 %v586
    %vm594 = vmor %vm592, %vm593
    %v595 = vsel %vm594, %v586, %v591
    %v596 = vmul.f32 %v564, %v585
    %v597 = vmul.f32 %v565, %v595
    %v599 = vsel %vm29, %v596, 0
    %601 = vmatpush.xpose.msra.mxu0 0.0
    %602 = vmatpush.xpose.msra.mxu0 0.0
    %603 = vmatpush.xpose.msra.mxu0 0.0
    %604 = vmatpush.xpose.msra.mxu0 0.0
    %605 = vmatpush.xpose.msra.mxu0 0.0
    %606 = vmatpush.xpose.msra.mxu0 0.0
    %607 = vmatpush.xpose.msra.mxu0 0.0
    %608 = vmatpush.xpose.msra.mxu0 0.0
    %609 = vmatpush.xpose.msra.mxu0 0.0
    %610 = vmatpush.xpose.msra.mxu0 0.0
    %611 = vmatpush.xpose.msra.mxu0 0.0
    %612 = vmatpush.xpose.msra.mxu0 0.0
    %613 = vmatpush.xpose.msra.mxu0 0.0
    %614 = vmatpush.xpose.msra.mxu0 0.0
    %615 = vmatpush.xpose.msra.mxu0 0.0
    %616 = vmatpush.xpose.msra.mxu0 %v599
    %617 = vmatmul.f32.gmra.mxu0 %v599
    %v618 = vpop.f32.mrf.mxu0
    %v619 = vadd.f32 0.0, %v618
    %620 = vdwg.mxu0
    %v622 = vsel %vm29, %v597, 0
    %624 = vmatpush.xpose.msra.mxu0 0.0
    %625 = vmatpush.xpose.msra.mxu0 0.0
    %626 = vmatpush.xpose.msra.mxu0 0.0
    %627 = vmatpush.xpose.msra.mxu0 0.0
    %628 = vmatpush.xpose.msra.mxu0 0.0
    %629 = vmatpush.xpose.msra.mxu0 0.0
    %630 = vmatpush.xpose.msra.mxu0 0.0
    %631 = vmatpush.xpose.msra.mxu0 0.0
    %632 = vmatpush.xpose.msra.mxu0 0.0
    %633 = vmatpush.xpose.msra.mxu0 0.0
    %634 = vmatpush.xpose.msra.mxu0 0.0
    %635 = vmatpush.xpose.msra.mxu0 0.0
    %636 = vmatpush.xpose.msra.mxu0 0.0
    %637 = vmatpush.xpose.msra.mxu0 0.0
    %638 = vmatpush.xpose.msra.mxu0 0.0
    %639 = vmatpush.xpose.msra.mxu0 %v622
    %640 = vmatmul.f32.gmra.mxu0 %v622
    %v641 = vpop.f32.mrf.mxu0
    %v642 = vadd.f32 0.0, %v641
    %643 = vdwg.mxu0
    %v644 = vmax.f32 %v619, -1.0
    %v645 = vmax.f32 %v642, -1.0
    %v646 = vmin.f32 %v644, 1.0
    %v647 = vmin.f32 %v645, 1.0
    %v648 = vlaneseq
    %v649 = vshrl.u32 %v648, 7
    %vm650 = vcmp.eq.s32.totalorder %v649, %v531
    %v651 = vsel %vm650, 1, 0
    %vm652 = vcmp.eq.s32.totalorder %v651, 1
    %v653 = vsel %vm652, 0.0, %v646
    %v654 = vsel %vm652, 0.0, %v647
    %v655 = vmul.f32 %v653, %v653
    %v656 = vmul.f32 %v654, %v654
    %vm657 = vcmask 27648
    %v658 = vsel %vm657, %v655, 0.0
    %659 = vadd.xlane.f32.xlu0 %v658
    %v660 = vpop.xlane.xlu0 %659
    %v661 = vsel %vm657, %v656, 0.0
    %662 = vadd.xlane.f32.xlu0 %v661
    %v663 = vpop.xlane.xlu0 %662
    %v666 = vperm.slane %v660, %v531
    %v667 = vperm.slane %v663, %v531
    %v668 = vsel %vm546, %v667, %v666
    %vm670 = vcmask 25600
    %v671 = vsel %vm670, %v668, 0.0
    %672 = vadd.xlane.f32.xlu0 %v671
    %v673 = vpop.xlane.xlu0 %672
    %v674 = vmul.f32 %v673, 0.1
    %v675 = vadd.f32 %v554, %v674
    %vm676 = vcmask 1024
    %v677 = vsel %vm676, %v675, 0.0
    %678 = vadd.xlane.f32.xlu0 %v677
    %v679 = vpop.xlane.xlu0 %678
    %v680 = vrot.slane %v679, 4
    %v681 = vadd.f32 %v679, %v680
    %v682 = vrot.slane %v681, 2
    %v683 = vadd.f32 %v681, %v682
    %v684 = vrot.slane %v683, 1
    %v685 = vadd.f32 %v683, %v684
    %s686 = vtos %v685
    %vm687 = vcmp.eq.s32.totalorder %v649, 0
    %vm688 = vcmp.eq.s32.totalorder %v531, 0
    %vm689 = vmand %vm687, %vm688
    %v690 = vstv %s686
    %v691 = vsel %vm689, %v690, 0.0
    %692 = vst [vmem:[#allocation2] sm:$0xff] %v691
    // Predicated region
    $region18: #{tpu_custom_call.1} parent=1 // pred_check
      _
    $region19: #{tpu_custom_call.1} parent=1 // pred_check_branch
      %694 = sbr.rel (0) target = $region21
    $region20: #{tpu_custom_call.1} parent=1 // pred_region
      %696 = vsyncadd [#allocation3], 0
      %s698 = sshll.u32 [#allocation2], 4
      %s699 = int_to_ptr.vmem [resolvable:$true] %s698
      %s700 = sshll.u32 %s4, 4
      %s701 = int_to_ptr.hbm [resolvable:$true] %s700
      %703 = dma.vmem_to_hbm [thread:$0]  %s699, 128, %s701, [#allocation3]
    $region21: #{tpu_custom_call.1} parent=1 // pred_fallthru
      _
    // Predicated region
    $region22: #{tpu_custom_call.1} parent=1 // pred_check
      _
    $region23: #{tpu_custom_call.1} parent=1 // pred_check_branch
      %705 = sbr.rel (0) target = $region25
    $region24: #{tpu_custom_call.1} parent=1 // pred_region
      %707 = dma.done [#allocation3], 128
    $region25: #{tpu_custom_call.1} parent=1 // pred_fallthru
      _
    %708 = vsyncpa [#allocation3], 1

</llo_original>
